<compile_context>
chip_gen: v7x
topology: tpu7x:2x2x1
jax: 0.10.0
libtpu: 0.0.40
codegen_flags: <defaults>
</compile_context>

<pallas_src>
import functools

import jax
import jax.numpy as jnp
from jax.experimental import pallas as pl
from jax.experimental.pallas import tpu as pltpu

_LANE = 128


def _round_up(x, m):
    return (x + m - 1) // m * m


# ----------------------------------------------------------------------------
# Generation-aware sizing (v5e/v6e: 128 MiB VMEM, v7x: 64 MiB VMEM)
# ----------------------------------------------------------------------------
def _hw_config():
    vmem_cap = 64 * 1024 * 1024  # conservative default (v7x-sized)
    try:
        info = pltpu.get_tpu_info()
        vmem_cap = int(getattr(info, "vmem_capacity_bytes", vmem_cap))
    except Exception:
        pass
    if vmem_cap >= 128 * 1024 * 1024:  # v5e / v6e
        return {
            "max_tile": 1024,
            "vmem_limit": 96 * 1024 * 1024,
            # VMEM allowance for the resident X block *including* its default
            # double-buffering (2 copies).
            "resident_x_bytes": 32 * 1024 * 1024,
        }
    # v7x: half the physical VMEM -> smaller tiles, tighter resident-X gate
    return {
        "max_tile": 512,
        "vmem_limit": 48 * 1024 * 1024,
        "resident_x_bytes": 16 * 1024 * 1024,
    }


def _choose_tiling(n, max_tile):
    """(8,128)-aligned tile size plus padded node count with >= 2 row tiles so
    the 'parallel' row axis shards across both v7x TensorCores."""
    tile = 128
    for t in (256, 512, 1024):
        if t <= max_tile and n >= 2 * t:
            tile = t
    n_pad = _round_up(max(n, 2 * tile), tile)
    return tile, n_pad


# ----------------------------------------------------------------------------
# Pallas kernel: one fused GCN layer   out = relu?((A_hat @ X) @ W + b)
# ----------------------------------------------------------------------------
def _gcn_layer_kernel(a_ref, x_ref, w_ref, b_ref, o_ref, acc_ref, *,
                      apply_relu, tile_k, x_resident):
    k = pl.program_id(1)

    @pl.when(k == 0)
    def _():
        acc_ref[...] = jnp.zeros_like(acc_ref)

    if x_resident:
        # whole (padded) X is VMEM-resident; pull out this reduction chunk
        start = pl.multiple_of(k * tile_k, tile_k)
        x_tile = x_ref[pl.ds(start, tile_k), :]
    else:
        x_tile = x_ref[...]

    # neighborhood aggregation tile: bf16 operands, f32 MXU accumulation
    acc_ref[...] += jnp.dot(a_ref[...], x_tile,
                            preferred_element_type=jnp.float32)

    @pl.when(k == pl.num_programs(1) - 1)
    def _():
        # small VMEM-resident feature transform (single bf16 MXU pass) + bias
        out = jnp.dot(acc_ref[...].astype(jnp.bfloat16), w_ref[...],
                      preferred_element_type=jnp.float32)
        out = out + b_ref[...]
        if apply_relu:
            out = jnp.maximum(out, 0.0)
        o_ref[...] = out.astype(o_ref.dtype)   # lane-dense store (bf16 or f32)


def gcn_layer(a_hat, x, w, b, *, tile, apply_relu, out_dtype, vmem_limit,
              resident_x_bytes):
    """a_hat: [Np, Np] bf16, x: [Np, Ci_pad] bf16, w: [Ci_pad, Co_pad] bf16,
    b: [1, Co_pad] f32  ->  [Np, Co_pad] out_dtype."""
    n_pad = a_hat.shape[0]
    cin_pad = x.shape[1]
    cout_pad = w.shape[1]
    grid = (n_pad // tile, n_pad // tile)

    # Keep X fully VMEM-resident (constant block index) when it fits; the gate
    # budgets for the default double-buffering of every input block.
    x_resident = 2 * (n_pad * cin_pad * 2) <= resident_x_bytes
    if x_resident:
        x_spec = pl.BlockSpec((n_pad, cin_pad), lambda i, k: (0, 0))
    else:
        x_spec = pl.BlockSpec((tile, cin_pad), lambda i, k: (k, 0))

    kernel = functools.partial(_gcn_layer_kernel, apply_relu=apply_relu,
                               tile_k=tile, x_resident=x_resident)
    return pl.pallas_call(
        kernel,
        out_shape=jax.ShapeDtypeStruct((n_pad, cout_pad), out_dtype),
        grid_spec=pltpu.PrefetchScalarGridSpec(
            num_scalar_prefetch=0,
            grid=grid,
            in_specs=[
                pl.BlockSpec((tile, tile), lambda i, k: (i, k)),          # A_hat
                x_spec,                                                   # X
                pl.BlockSpec((cin_pad, cout_pad), lambda i, k: (0, 0)),   # W
                pl.BlockSpec((1, cout_pad), lambda i, k: (0, 0)),         # b
            ],
            out_specs=pl.BlockSpec((tile, cout_pad), lambda i, k: (i, 0)),
            scratch_shapes=[pltpu.VMEM((tile, cin_pad), jnp.float32)],
        ),
        compiler_params=pltpu.CompilerParams(
            dimension_semantics=("parallel", "arbitrary"),
            vmem_limit_bytes=vmem_limit,
        ),
    )(a_hat, x, w, b)


# ----------------------------------------------------------------------------
# Glue: dense GCN-normalized adjacency from edge_index (plain JAX)
# ----------------------------------------------------------------------------
def build_normalized_adjacency(edge_index, num_nodes):
    """A_hat[dst, src] = deg^{-1/2}[src] * deg^{-1/2}[dst], self-loops added
    (GCNConv normalize=True, improved=False)."""
    src, dst = edge_index[0], edge_index[1]
    loop = jnp.arange(num_nodes, dtype=edge_index.dtype)
    src = jnp.concatenate([src, loop])
    dst = jnp.concatenate([dst, loop])
    deg = jnp.zeros((num_nodes,), jnp.float32).at[dst].add(1.0)
    deg_inv_sqrt = jnp.where(deg > 0, jax.lax.rsqrt(deg), 0.0)
    norm = deg_inv_sqrt[src] * deg_inv_sqrt[dst]
    a_hat = jnp.zeros((num_nodes, num_nodes), jnp.float32).at[dst, src].add(norm)
    return a_hat


def prepare_adjacency(edge_index, num_nodes, n_pad):
    a_hat = build_normalized_adjacency(edge_index, num_nodes)
    # cast BEFORE padding: never materialize an N_pad^2 f32 intermediate
    return jnp.pad(a_hat.astype(jnp.bfloat16),
                   ((0, n_pad - num_nodes), (0, n_pad - num_nodes)))


# ----------------------------------------------------------------------------
# Parameters (glorot-uniform like GCNConv) and forward pass
# ----------------------------------------------------------------------------
def init_gnn_params(key, in_channels, hidden_channels, out_channels, num_layers):
    params = []
    dims = []
    if num_layers == 1:
        dims.append((in_channels, out_channels))
    else:
        for i in range(num_layers):
            ci = in_channels if i == 0 else hidden_channels
            co = out_channels if i == num_layers - 1 else hidden_channels
            dims.append((ci, co))
    for ci, co in dims:
        key, wk = jax.random.split(key)
        scale = jnp.sqrt(6.0 / (ci + co))
        w = jax.random.uniform(wk, (ci, co), jnp.float32, -scale, scale)
        b = jnp.zeros((co,), jnp.float32)
        params.append((w, b))
    return params


def gnn_forward(x, edge_index, params):
    n, c_in = x.shape
    cfg = _hw_config()
    tile, n_pad = _choose_tiling(n, cfg["max_tile"])

    # NOTE: for repeated inference on a static graph, hoist prepare_adjacency
    # (and the per-layer W/b padding below) out of the per-call path.
    a_pad = prepare_adjacency(edge_index, n, n_pad)

    cin_pad = _round_up(c_in, _LANE)
    h = jnp.pad(x, ((0, n_pad - n), (0, cin_pad - c_in))).astype(jnp.bfloat16)

    num_layers = len(params)
    for i, (w, b) in enumerate(params):
        last = i == num_layers - 1
        apply_relu = (not last) or (num_layers == 1)
        ci, co = w.shape
        ci_pad = _round_up(ci, _LANE)
        co_pad = _round_up(co, _LANE)
        w_pad = jnp.pad(w, ((0, ci_pad - ci), (0, co_pad - co))).astype(jnp.bfloat16)
        b_pad = jnp.pad(b, (0, co_pad - co)).reshape(1, co_pad)
        h = gcn_layer(
            a_pad, h, w_pad, b_pad,
            tile=tile, apply_relu=apply_relu,
            out_dtype=jnp.float32 if last else jnp.bfloat16,
            vmem_limit=cfg["vmem_limit"],
            resident_x_bytes=cfg["resident_x_bytes"])
    out_c = params[-1][0].shape[1]
    return h[:n, :out_c]


# pure-JAX reference mirroring the kernel numerics (bf16 streamed operands,
# bf16 finalize matmul, f32 accumulation, bf16 inter-layer activations)
def gnn_forward_ref(x, edge_index, params):
    a = build_normalized_adjacency(edge_index, x.shape[0]).astype(jnp.bfloat16)
    h = x.astype(jnp.bfloat16)
    num_layers = len(params)
    for i, (w, b) in enumerate(params):
        last = i == num_layers - 1
        agg = jnp.dot(a, h, preferred_element_type=jnp.float32)
        out = jnp.dot(agg.astype(jnp.bfloat16), w.astype(jnp.bfloat16),
                      preferred_element_type=jnp.float32) + b[None, :]
        if (not last) or (num_layers == 1):
            out = jnp.maximum(out, 0.0)
        h = out if last else out.astype(jnp.bfloat16)
    return h


if __name__ == "__main__":
    N = 128            # nodes
    E = 512            # edges
    IN_C, HID_C, OUT_C = 16, 32, 8
    NUM_LAYERS = 2

    key = jax.random.PRNGKey(0)
    kx, ke, kp = jax.random.split(key, 3)

    x = jax.random.normal(kx, (N, IN_C), jnp.float32)
    edge_index = jax.random.randint(ke, (2, E), 0, N, dtype=jnp.int32)
    params = init_gnn_params(kp, IN_C, HID_C, OUT_C, NUM_LAYERS)

    out = jax.block_until_ready(gnn_forward(x, edge_index, params))
    ref = jax.block_until_ready(gnn_forward_ref(x, edge_index, params))

    assert out.shape == (N, OUT_C), out.shape
    # tolerance covers bf16 rounding-boundary differences between the tiled
    # kernel accumulation order and the single-shot reference dot
    assert jnp.allclose(out, ref, atol=1e-2, rtol=1e-2), "mismatch vs reference"
    print("KERNEL_OK")
</pallas_src>

<mosaic_0001>
module attributes {stable_mosaic.version = 11 : i64} {
  func.func @_gcn_layer_kernel(%arg0: i32, %arg1: i32, %arg2: memref<128x128xbf16, #tpu.memory_space<vmem>>, %arg3: memref<256x128xbf16, #tpu.memory_space<vmem>>, %arg4: memref<128x128xbf16, #tpu.memory_space<vmem>>, %arg5: memref<1x128xf32, #tpu.memory_space<vmem>>, %arg6: memref<128x128xbf16, #tpu.memory_space<vmem>>, %arg7: memref<128x128xf32, #tpu.memory_space<vmem>>) attributes {dimension_semantics = [#tpu.dimension_semantics<parallel>, #tpu.dimension_semantics<arbitrary>], iteration_bounds = array<i64: 2, 2>, scalar_prefetch = 0 : i64, scratch_operands = 1 : i64, tpu.core_type = #tpu.core_type<tc>, window_params = [{transform_indices = @transform_0, window_bounds = array<i64: 128, 128>}, {pipeline_mode = #tpu.pipeline_mode<synchronous>, transform_indices = @transform_1, window_bounds = array<i64: 256, 128>}, {pipeline_mode = #tpu.pipeline_mode<synchronous>, transform_indices = @transform_2, window_bounds = array<i64: 128, 128>}, {pipeline_mode = #tpu.pipeline_mode<synchronous>, transform_indices = @transform_3, window_bounds = array<i64: 1, 128>}, {transform_indices = @transform_4, window_bounds = array<i64: 128, 128>}]} {
    %c0_i32 = arith.constant 0 : i32
    %0 = arith.cmpi eq, %arg1, %c0_i32 : i32
    %1 = arith.extui %0 : i1 to i32
    %c0_i32_0 = arith.constant 0 : i32
    %2 = arith.cmpi ne, %1, %c0_i32_0 : i32
    scf.if %2 {
      %cst_8 = arith.constant 0.000000e+00 : f32
      %15 = vector.broadcast %cst_8 : f32 to vector<128x128xf32>
      %c0_9 = arith.constant 0 : index
      %c0_10 = arith.constant 0 : index
      %16 = vector.load %arg7[%c0_9, %c0_10] : memref<128x128xf32, #tpu.memory_space<vmem>>, vector<128x128xf32>
      tpu.vector_store %arg7[%c0_9, %c0_10], %15 {strides = array<i32>} : memref<128x128xf32, #tpu.memory_space<vmem>>, vector<128x128xf32>,
    } else {
    }
    %c128_i32 = arith.constant 128 : i32
    %3 = arith.muli %arg1, %c128_i32 : i32
    %4 = tpu.assume_multiple %3, 128 : i32
    %5 = arith.index_cast %4 : i32 to index
    %c0 = arith.constant 0 : index
    %6 = vector.load %arg3[%5, %c0] : memref<256x128xbf16, #tpu.memory_space<vmem>>, vector<128x128xbf16>
    %c0_1 = arith.constant 0 : index
    %c0_2 = arith.constant 0 : index
    %7 = vector.load %arg7[%c0_1, %c0_2] : memref<128x128xf32, #tpu.memory_space<vmem>>, vector<128x128xf32>
    %c0_3 = arith.constant 0 : index
    %c0_4 = arith.constant 0 : index
    %8 = vector.load %arg2[%c0_3, %c0_4] : memref<128x128xbf16, #tpu.memory_space<vmem>>, vector<128x128xbf16>
    %cst = arith.constant dense<0.000000e+00> : vector<128x128xf32>
    %9 = tpu.matmul %8, %6, %cst {dimension_numbers = #tpu.dot_dimension_numbers<[1], [0], [0], [1], [0, 0, 1, 1], [], []>} : vector<128x128xbf16>, vector<128x128xbf16>, vector<128x128xf32> -> vector<128x128xf32>
    %10 = arith.addf %7, %9 : vector<128x128xf32>
    %c0_5 = arith.constant 0 : index
    %c0_6 = arith.constant 0 : index
    %11 = vector.load %arg7[%c0_5, %c0_6] : memref<128x128xf32, #tpu.memory_space<vmem>>, vector<128x128xf32>
    tpu.vector_store %arg7[%c0_5, %c0_6], %10 {strides = array<i32>} : memref<128x128xf32, #tpu.memory_space<vmem>>, vector<128x128xf32>,
    %c1_i32 = arith.constant 1 : i32
    %12 = arith.cmpi eq, %arg1, %c1_i32 : i32
    %13 = arith.extui %12 : i1 to i32
    %c0_i32_7 = arith.constant 0 : i32
    %14 = arith.cmpi ne, %13, %c0_i32_7 : i32
    scf.if %14 {
      %c0_8 = arith.constant 0 : index
      %c0_9 = arith.constant 0 : index
      %15 = vector.load %arg7[%c0_8, %c0_9] : memref<128x128xf32, #tpu.memory_space<vmem>>, vector<128x128xf32>
      %16 = arith.truncf %15 : vector<128x128xf32> to vector<128x128xbf16>
      %c0_10 = arith.constant 0 : index
      %c0_11 = arith.constant 0 : index
      %17 = vector.load %arg4[%c0_10, %c0_11] : memref<128x128xbf16, #tpu.memory_space<vmem>>, vector<128x128xbf16>
      %cst_12 = arith.constant dense<0.000000e+00> : vector<128x128xf32>
      %18 = tpu.matmul %16, %17, %cst_12 {dimension_numbers = #tpu.dot_dimension_numbers<[1], [0], [0], [1], [0, 0, 1, 1], [], []>} : vector<128x128xbf16>, vector<128x128xbf16>, vector<128x128xf32> -> vector<128x128xf32>
      %c0_13 = arith.constant 0 : index
      %c0_14 = arith.constant 0 : index
      %19 = vector.load %arg5[%c0_13, %c0_14] : memref<1x128xf32, #tpu.memory_space<vmem>>, vector<1x128xf32>
      %20 = vector.broadcast %19 : vector<1x128xf32> to vector<128x128xf32>
      %21 = arith.addf %18, %20 : vector<128x128xf32>
      %cst_15 = arith.constant 0.000000e+00 : f32
      %22 = vector.broadcast %cst_15 : f32 to vector<128x128xf32>
      %23 = arith.maximumf %21, %22 : vector<128x128xf32>
      %24 = arith.truncf %23 : vector<128x128xf32> to vector<128x128xbf16>
      %c0_16 = arith.constant 0 : index
      %c0_17 = arith.constant 0 : index
      %25 = vector.load %arg6[%c0_16, %c0_17] : memref<128x128xbf16, #tpu.memory_space<vmem>>, vector<128x128xbf16>
      tpu.vector_store %arg6[%c0_16, %c0_17], %24 {strides = array<i32>} : memref<128x128xbf16, #tpu.memory_space<vmem>>, vector<128x128xbf16>,
    } else {
    }
    return
  }
  func.func @transform_0(%arg0: i32, %arg1: i32) -> (i32, i32) {
    %c0_i32 = arith.constant 0 : i32
    return %arg0, %arg1 : i32, i32
  }
  func.func @transform_1(%arg0: i32, %arg1: i32) -> (i32, i32) {
    %c0_i32 = arith.constant 0 : i32
    %c0_i32_0 = arith.constant 0 : i32
    %c0_i32_1 = arith.constant 0 : i32
    return %c0_i32, %c0_i32_0 : i32, i32
  }
  func.func @transform_2(%arg0: i32, %arg1: i32) -> (i32, i32) {
    %c0_i32 = arith.constant 0 : i32
    %c0_i32_0 = arith.constant 0 : i32
    %c0_i32_1 = arith.constant 0 : i32
    return %c0_i32, %c0_i32_0 : i32, i32
  }
  func.func @transform_3(%arg0: i32, %arg1: i32) -> (i32, i32) {
    %c0_i32 = arith.constant 0 : i32
    %c0_i32_0 = arith.constant 0 : i32
    %c0_i32_1 = arith.constant 0 : i32
    return %c0_i32, %c0_i32_0 : i32, i32
  }
  func.func @transform_4(%arg0: i32, %arg1: i32) -> (i32, i32) {
    %c0_i32 = arith.constant 0 : i32
    %c0_i32_0 = arith.constant 0 : i32
    return %arg0, %c0_i32 : i32, i32
  }
}

</mosaic_0001>

<llo_original>
// kernel: tpu_custom_call.1
$region0: #{tpu_custom_call.1}
  #allocation0 [shape = 'u32[]', space=smem, size = 0x4, offset = 0x4, fixed_abs, tag = 'smem constant byte address 0x4 - core index']
  #allocation1 [shape = 'u32[144,128]{1,0:T(1,128)}', space=vmem, size = 0x12000, scoped, tag = 'internal scratch']
  #allocation2 [shape = 'f32[128,128]{1,0:T(8,128)}', space=vmem, size = 0x10000, scoped, tag = 'scratch operand']
  %s0 = inlined_call_operand.hbm [shape: bf16[256,256], index: 0, kind: input, shape index: {}]
  %s1 = inlined_call_operand.hbm [shape: bf16[256,128], index: 1, kind: input, shape index: {}]
  %s2 = inlined_call_operand.hbm [shape: bf16[128,128], index: 2, kind: input, shape index: {}]
  %s3 = inlined_call_operand.vmem [shape: f32[1,128], index: 3, kind: input, shape index: {}]
  %s4 = inlined_call_operand.hbm [shape: bf16[256,128], index: 4, kind: output, shape index: {}]
  %s5 = sld [smem:[#allocation0]]
  $region69: #{tpu_custom_call.1} parent=0
    _
  %s7 = ssub.s32 1, %s5
  %s8 = scalar_select 0, %s7, %s5
  $region1: #{tpu_custom_call.1} parent=0
    #allocation3 [shape = 'u8[65536]{0}', space=vmem, size = 0x10000, scoped, tag = 'input window, operand 0']
    #allocation4 [shape = 's32[2]{0}', space=sflag, size = 0x8, scoped, tag = 'scoped memory for tpu_custom_call.1']
    #allocation5 [shape = 's32[2]{0}', space=sflag, size = 0x8, scoped, tag = 'scoped memory for tpu_custom_call.1']
    #allocation6 [shape = 'u8[65536]{0}', space=vmem, size = 0x10000, scoped, tag = 'input window, operand 1, single buffered']
    #allocation7 [shape = 's32[1]{0}', space=sflag, size = 0x4, scoped, tag = 'scoped memory for tpu_custom_call.1']
    #allocation8 [shape = 'u8[32768]{0}', space=vmem, size = 0x8000, scoped, tag = 'input window, operand 2, single buffered']
    #allocation9 [shape = 'u8[65536]{0}', space=vmem, size = 0x10000, scoped, tag = 'output window, operand 0']
    %9 = vsyncpa [#allocation4], 0
    %s10 = scalar_lea.sflag [#allocation4], 1
    %11 = vsyncpa %s10, 0
    %12 = vsyncpa [#allocation7], 0
    %13 = vsyncpa [#allocation5], 0
    %s14 = scalar_lea.sflag [#allocation5], 1
    %15 = vsyncpa %s14, 0
    loop: start=0, step=1, limit=6
    $region2: #{tpu_custom_call.1} parent=1 // loop_pre_header
      _
    $region3: #{tpu_custom_call.1} parent=1 // loop_header
      %s17 = sphi 0, %s21
      %p18 = scmp.ge.s32.totalorder %s17, 6
      %s24 = sphi 0, %s36
      %s25 = sphi 0, %s32
      %s26 = sphi 0, %s24
      %s27 = sphi 0, %s25
      %s28 = sphi 0, %s26
      %s29 = sphi 0, %s27
      %s41 = sphi 0, %s43
      %s44 = sphi 0, %s41
      %s45 = sphi 0, %s44
      %s61 = sphi 0, %s45
      %s65 = sphi 0, %s65
      %s67 = sphi 0, %s65
      %s68 = sphi 0, %s67
      %s82 = sphi 0, %s68
      %s86 = sphi 0, %s86
      %s88 = sphi 0, %s86
      %s89 = sphi 0, %s88
      %s103 = sphi 0, %s89
      %s107 = sphi 0, %s107
      %s109 = sphi 0, %s107
      %s110 = sphi 0, %s109
      %s124 = sphi 0, %s110
      %s130 = sphi 0, %s132
      %s133 = sphi 0, %s130
      %s134 = sphi 0, %s133
      %s150 = sphi 0, %s134
    $region4: #{tpu_custom_call.1} parent=1 // loop_header_branch
      %20 = sbr.rel (%p18) target = $region8
    $region5: #{tpu_custom_call.1} parent=1 // loop_body
      %s22 = ssub.s32 %s17, 1
      %s23 = ssub.s32 %s17, 2
      %s30 = sadd.s32 1, %s25
      %p31 = scmp.ge.s32.totalorder %s30, 2
      %s32 = scalar_select %p31, 0, %s30
      %s33 = sadd.s32 1, %s24
      %s34 = scalar_select %p31, %s33, %s24
      %p35 = scmp.ge.s32.totalorder %s34, 2
      %s36 = scalar_select %p35, 0, %s34
      %s37 = ssub.s32 %s24, %s36
      %s38 = ssub.s32 %s25, %s32
      %s39 = sor.u32 %s37, %s38
      %p40 = scmp.eq.s32.totalorder %s39, 0
      %s42 = sadd.s32 %s41, 1
      %s43 = scalar_select %p40, %s41, %s42
      %p46 = pneg %p40
      %p47 = scmp.eq.s32.totalorder %s17, 3
      %p48 = por %p46, %p47
      %p49 = scmp.ne.s32.totalorder %s41, %s44
      %p50 = scmp.eq.s32.totalorder %s17, 0
      %p51 = por %p49, %p50
      %p52 = scmp.ne.s32.totalorder %s41, %s44
      %p53 = scmp.eq.s32.totalorder %s22, 3
      %p54 = por %p52, %p53
      %p55 = scmp.ne.s32.totalorder %s44, %s45
      %p56 = scmp.eq.s32.totalorder %s22, 0
      %p57 = por %p55, %p56
      %p58 = scmp.ne.s32.totalorder %s44, %s45
      %p59 = scmp.eq.s32.totalorder %s23, 3
      %p60 = por %p58, %p59
      %p62 = scmp.ne.s32.totalorder %s45, %s61
      %p63 = scmp.eq.s32.totalorder %s23, 0
      %p64 = por %p62, %p63
      %s66 = sadd.s32 %s65, 1
      %p69 = scmp.eq.s32.totalorder %s17, 3
      %p70 = scmp.ne.s32.totalorder %s65, %s67
      %p71 = scmp.eq.s32.totalorder %s17, 0
      %p72 = por %p70, %p71
      %p73 = scmp.ne.s32.totalorder %s65, %s67
      %p74 = scmp.eq.s32.totalorder %s22, 3
      %p75 = por %p73, %p74
      %p76 = scmp.ne.s32.totalorder %s67, %s68
      %p77 = scmp.eq.s32.totalorder %s22, 0
      %p78 = por %p76, %p77
      %p79 = scmp.ne.s32.totalorder %s67, %s68
      %p80 = scmp.eq.s32.totalorder %s23, 3
      %p81 = por %p79, %p80
      %p83 = scmp.ne.s32.totalorder %s68, %s82
      %p84 = scmp.eq.s32.totalorder %s23, 0
      %p85 = por %p83, %p84
      %s87 = sadd.s32 %s86, 1
      %p90 = scmp.eq.s32.totalorder %s17, 3
      %p91 = scmp.ne.s32.totalorder %s86, %s88
      %p92 = scmp.eq.s32.totalorder %s17, 0
      %p93 = por %p91, %p92
      %p94 = scmp.ne.s32.totalorder %s86, %s88
      %p95 = scmp.eq.s32.totalorder %s22, 3
      %p96 = por %p94, %p95
      %p97 = scmp.ne.s32.totalorder %s88, %s89
      %p98 = scmp.eq.s32.totalorder %s22, 0
      %p99 = por %p97, %p98
      %p100 = scmp.ne.s32.totalorder %s88, %s89
      %p101 = scmp.eq.s32.totalorder %s23, 3
      %p102 = por %p100, %p101
      %p104 = scmp.ne.s32.totalorder %s89, %s103
      %p105 = scmp.eq.s32.totalorder %s23, 0
      %p106 = por %p104, %p105
      %s108 = sadd.s32 %s107, 1
      %p111 = scmp.eq.s32.totalorder %s17, 3
      %p112 = scmp.ne.s32.totalorder %s107, %s109
      %p113 = scmp.eq.s32.totalorder %s17, 0
      %p114 = por %p112, %p113
      %p115 = scmp.ne.s32.totalorder %s107, %s109
      %p116 = scmp.eq.s32.totalorder %s22, 3
      %p117 = por %p115, %p116
      %p118 = scmp.ne.s32.totalorder %s109, %s110
      %p119 = scmp.eq.s32.totalorder %s22, 0
      %p120 = por %p118, %p119
      %p121 = scmp.ne.s32.totalorder %s109, %s110
      %p122 = scmp.eq.s32.totalorder %s23, 3
      %p123 = por %p121, %p122
      %p125 = scmp.ne.s32.totalorder %s110, %s124
      %p126 = scmp.eq.s32.totalorder %s23, 0
      %p127 = por %p125, %p126
      %s128 = ssub.s32 %s24, %s36
      %p129 = scmp.eq.s32.totalorder %s128, 0
      %s131 = sadd.s32 %s130, 1
      %s132 = scalar_select %p129, %s130, %s131
      %p135 = pneg %p129
      %p136 = scmp.eq.s32.totalorder %s17, 3
      %p137 = por %p135, %p136
      %p138 = scmp.ne.s32.totalorder %s130, %s133
      %p139 = scmp.eq.s32.totalorder %s17, 0
      %p140 = por %p138, %p139
      %p141 = scmp.ne.s32.totalorder %s130, %s133
      %p142 = scmp.eq.s32.totalorder %s22, 3
      %p143 = por %p141, %p142
      %p144 = scmp.ne.s32.totalorder %s133, %s134
      %p145 = scmp.eq.s32.totalorder %s22, 0
      %p146 = por %p144, %p145
      %p147 = scmp.ne.s32.totalorder %s133, %s134
      %p148 = scmp.eq.s32.totalorder %s23, 3
      %p149 = por %p147, %p148
      %p151 = scmp.ne.s32.totalorder %s134, %s150
      %p152 = scmp.eq.s32.totalorder %s23, 0
      %p153 = por %p151, %p152
      %p154 = scmp.le.s32.totalorder 1, %s17
      %p155 = scmp.lt.s32.totalorder %s17, 5
      %p156 = pnand %p154, %p155
      %p157 = pneg %p156
      // Predicated region
      $region9: #{tpu_custom_call.1} parent=5 // pred_check
        _
      $region10: #{tpu_custom_call.1} parent=5 // pred_check_branch
        %159 = sbr.rel (%p156) target = $region12
      $region11: #{tpu_custom_call.1} parent=5 // pred_region
        %s160 = ssub.s32 %s17, 1
        // Predicated region
        $region13: #{tpu_custom_call.1} parent=11 // pred_check
          %p161 = pneg %p78
        $region14: #{tpu_custom_call.1} parent=11 // pred_check_branch
          %163 = sbr.rel (%p161) target = $region16
        $region15: #{tpu_custom_call.1} parent=11 // pred_region
          %s165 = ssub.s32 2048, 2048
          %166 = vsyncadd [#allocation7], %s165
          %s167 = sshll.u32 [#allocation6], 4
          %s168 = int_to_ptr.vmem [resolvable:$true] %s167
          %173 = dma.hbm_to_vmem [thread:$0]  %s1, 2048, %s168, [#allocation7], 64, 64, 4
        $region16: #{tpu_custom_call.1} parent=11 // pred_fallthru
          _
        // Predicated region
        $region17: #{tpu_custom_call.1} parent=11 // pred_check
          %p174 = pneg %p99
        $region18: #{tpu_custom_call.1} parent=11 // pred_check_branch
          %176 = sbr.rel (%p174) target = $region20
        $region19: #{tpu_custom_call.1} parent=11 // pred_region
          %s178 = ssub.s32 1024, 1024
          %179 = vsyncadd [#allocation7], %s178
          %s180 = sshll.u32 [#allocation8], 4
          %s181 = int_to_ptr.vmem [resolvable:$true] %s180
          %186 = dma.hbm_to_vmem [thread:$0]  %s2, 1024, %s181, [#allocation7], 64, 64, 4
        $region20: #{tpu_custom_call.1} parent=11 // pred_fallthru
          _
        // Predicated region
        $region21: #{tpu_custom_call.1} parent=11 // pred_check
          %p187 = pneg %p120
        $region22: #{tpu_custom_call.1} parent=11 // pred_check_branch
          %189 = sbr.rel (%p187) target = $region24
        $region23: #{tpu_custom_call.1} parent=11 // pred_region
          _
        $region24: #{tpu_custom_call.1} parent=11 // pred_fallthru
          _
      $region12: #{tpu_custom_call.1} parent=5 // pred_fallthru
        _
      %p190 = scmp.lt.s32.totalorder %s17, 4
      // Predicated region
      $region25: #{tpu_custom_call.1} parent=5 // pred_check
        %p191 = pneg %p190
      $region26: #{tpu_custom_call.1} parent=5 // pred_check_branch
        %193 = sbr.rel (%p191) target = $region28
      $region27: #{tpu_custom_call.1} parent=5 // pred_region
        // Predicated region
        $region29: #{tpu_custom_call.1} parent=27 // pred_check
          %p194 = pneg %p51
        $region30: #{tpu_custom_call.1} parent=27 // pred_check_branch
          %196 = sbr.rel (%p194) target = $region32
        $region31: #{tpu_custom_call.1} parent=27 // pred_region
          %s197 = sand.u32 %s41, 1
          %s198 = scalar_lea.sflag [#allocation4], %s197
          %s199 = sand.u32 %s41, 1
          %s200 = smul.addr %s199, 64
          %s201 = scalar_lea.vmem [#allocation3], %s200
          %s202 = smul.u32 16, %s24
          %s204 = ssub.s32 1024, 1024
          %205 = vsyncadd %s198, %s204
          %s206 = smul.addr %s202, 2
          %s207 = sadd.s32 %s25, %s206
          %s208 = smul.addr %s207, 64
          %s209 = scalar_lea.hbm %s0, %s208
          %s210 = sshll.u32 %s201, 4
          %s211 = int_to_ptr.vmem [resolvable:$true] %s210
          %216 = dma.hbm_to_vmem [thread:$0]  %s209, 1024, %s211, %s198, 128, 64, 4
        $region32: #{tpu_custom_call.1} parent=27 // pred_fallthru
          _
      $region28: #{tpu_custom_call.1} parent=5 // pred_fallthru
        _
      %p217 = scmp.le.s32.totalorder 1, %s17
      %p218 = scmp.lt.s32.totalorder %s17, 5
      %p219 = pnand %p217, %p218
      %p220 = pneg %p219
      // Predicated region
      $region33: #{tpu_custom_call.1} parent=5 // pred_check
        _
      $region34: #{tpu_custom_call.1} parent=5 // pred_check_branch
        %222 = sbr.rel (%p219) target = $region36
      $region35: #{tpu_custom_call.1} parent=5 // pred_region
        %s223 = ssub.s32 %s17, 1
        %s224 = sand.u32 %s44, 1
        %s225 = scalar_lea.sflag [#allocation4], %s224
        %s226 = sand.u32 %s44, 1
        %s227 = smul.addr %s226, 64
        %s228 = scalar_lea.vmem [#allocation3], %s227
        // Predicated region
        $region37: #{tpu_custom_call.1} parent=35 // pred_check
          %p229 = pneg %p57
        $region38: #{tpu_custom_call.1} parent=35 // pred_check_branch
          %231 = sbr.rel (%p229) target = $region40
        $region39: #{tpu_custom_call.1} parent=35 // pred_region
          %232 = dma.done %s225, 1024
        $region40: #{tpu_custom_call.1} parent=35 // pred_fallthru
          _
        // Predicated region
        $region41: #{tpu_custom_call.1} parent=35 // pred_check
          %p233 = pneg %p78
        $region42: #{tpu_custom_call.1} parent=35 // pred_check_branch
          %235 = sbr.rel (%p233) target = $region44
        $region43: #{tpu_custom_call.1} parent=35 // pred_region
          %236 = dma.done [#allocation7], 2048
        $region44: #{tpu_custom_call.1} parent=35 // pred_fallthru
          _
        // Predicated region
        $region45: #{tpu_custom_call.1} parent=35 // pred_check
          %p237 = pneg %p99
        $region46: #{tpu_custom_call.1} parent=35 // pred_check_branch
          %239 = sbr.rel (%p237) target = $region48
        $region47: #{tpu_custom_call.1} parent=35 // pred_region
          %240 = dma.done [#allocation7], 1024
        $region48: #{tpu_custom_call.1} parent=35 // pred_fallthru
          _
        %s241 = sand.u32 %s44, 1
        %s242 = scalar_lea.sflag [#allocation4], %s241
        %s243 = sand.u32 %s44, 1
        %s244 = smul.addr %s243, 64
        %s245 = scalar_lea.vmem [#allocation3], %s244
        %p246 = pneg %p57
        %p247 = pneg %p54
        %p248 = pneg %p78
        %p249 = pneg %p75
        %p250 = pneg %p99
        %p251 = pneg %p96
        %p252 = pneg %p120
        %p253 = pneg %p117
        %p254 = pneg %p146
        %p255 = pneg %p143
        %s256 = sand.u32 %s133, 1
        %s257 = scalar_lea.sflag [#allocation5], %s256
        %s258 = sand.u32 %s133, 1
        %s259 = smul.addr %s258, 64
        %s260 = scalar_lea.vmem [#allocation9], %s259
        %s261 = smul.u32 16, %s26
        %s262 = smul.u32 16, %s26
        %p264 = scmp.eq.s32.totalorder %s27, 0
        // Predicated region
        $region49: #{tpu_custom_call.1} parent=35 // pred_check
          %p265 = pneg %p264
        $region50: #{tpu_custom_call.1} parent=35 // pred_check_branch
          %267 = sbr.rel (%p265) target = $region52
        $region51: #{tpu_custom_call.1} parent=35 // pred_region
          %268 = vst [vmem:[#allocation2] sm:$0xff] 0.0
          %269 = vst [vmem:[#allocation2 + $0x8] sm:$0xff] 0.0
          %270 = vst [vmem:[#allocation2 + $0x10] sm:$0xff] 0.0
          %271 = vst [vmem:[#allocation2 + $0x18] sm:$0xff] 0.0
          %272 = vst [vmem:[#allocation2 + $0x20] sm:$0xff] 0.0
          %273 = vst [vmem:[#allocation2 + $0x28] sm:$0xff] 0.0
          %274 = vst [vmem:[#allocation2 + $0x30] sm:$0xff] 0.0
          %275 = vst [vmem:[#allocation2 + $0x38] sm:$0xff] 0.0
          %276 = vst [vmem:[#allocation2 + $0x40] sm:$0xff] 0.0
          %277 = vst [vmem:[#allocation2 + $0x48] sm:$0xff] 0.0
          %278 = vst [vmem:[#allocation2 + $0x50] sm:$0xff] 0.0
          %279 = vst [vmem:[#allocation2 + $0x58] sm:$0xff] 0.0
          %280 = vst [vmem:[#allocation2 + $0x60] sm:$0xff] 0.0
          %281 = vst [vmem:[#allocation2 + $0x68] sm:$0xff] 0.0
          %282 = vst [vmem:[#allocation2 + $0x70] sm:$0xff] 0.0
          %283 = vst [vmem:[#allocation2 + $0x78] sm:$0xff] 0.0
        $region52: #{tpu_custom_call.1} parent=35 // pred_fallthru
          _
        %s284 = smul.u32 %s27, 128
        %s285 = sshra.s32 %s284, 3
        %s286 = sand.u32 %s284, 7
        %s287 = smul.addr %s285, 4
        %s288 = scalar_lea.vmem [#allocation6], %s287
        %v289 = vld [vmem:[%s288] sm:$0xf]
        %v290 = vld [vmem:[%s288 + $0x4] sm:$0xf]
        %v291 = vld [vmem:[%s288 + $0x8] sm:$0xf]
        %v292 = vld [vmem:[%s288 + $0xc] sm:$0xf]
        %v293 = vld [vmem:[%s288 + $0x10] sm:$0xf]
        %v294 = vld [vmem:[%s288 + $0x14] sm:$0xf]
        %v295 = vld [vmem:[%s288 + $0x18] sm:$0xf]
        %v296 = vld [vmem:[%s288 + $0x1c] sm:$0xf]
        %v297 = vld [vmem:[%s288 + $0x20] sm:$0xf]
        %v298 = vld [vmem:[%s288 + $0x24] sm:$0xf]
        %v299 = vld [vmem:[%s288 + $0x28] sm:$0xf]
        %v300 = vld [vmem:[%s288 + $0x2c] sm:$0xf]
        %v301 = vld [vmem:[%s288 + $0x30] sm:$0xf]
        %v302 = vld [vmem:[%s288 + $0x34] sm:$0xf]
        %v303 = vld [vmem:[%s288 + $0x38] sm:$0xf]
        %v304 = vld [vmem:[%s288 + $0x3c] sm:$0xf]
        %v305 = vld [vmem:[#allocation2] sm:$0xff]
        %v306 = vld [vmem:[#allocation2 + $0x8] sm:$0xff]
        %v307 = vld [vmem:[#allocation2 + $0x10] sm:$0xff]
        %v308 = vld [vmem:[#allocation2 + $0x18] sm:$0xff]
        %v309 = vld [vmem:[#allocation2 + $0x20] sm:$0xff]
        %v310 = vld [vmem:[#allocation2 + $0x28] sm:$0xff]
        %v311 = vld [vmem:[#allocation2 + $0x30] sm:$0xff]
        %v312 = vld [vmem:[#allocation2 + $0x38] sm:$0xff]
        %v313 = vld [vmem:[#allocation2 + $0x40] sm:$0xff]
        %v314 = vld [vmem:[#allocation2 + $0x48] sm:$0xff]
        %v315 = vld [vmem:[#allocation2 + $0x50] sm:$0xff]
        %v316 = vld [vmem:[#allocation2 + $0x58] sm:$0xff]
        %v317 = vld [vmem:[#allocation2 + $0x60] sm:$0xff]
        %v318 = vld [vmem:[#allocation2 + $0x68] sm:$0xff]
        %v319 = vld [vmem:[#allocation2 + $0x70] sm:$0xff]
        %v320 = vld [vmem:[#allocation2 + $0x78] sm:$0xff]
        %v321 = vld [vmem:[%s228] sm:$0xf]
        %v322 = vld [vmem:[%s228 + $0x4] sm:$0xf]
        %v323 = vld [vmem:[%s228 + $0x8] sm:$0xf]
        %v324 = vld [vmem:[%s228 + $0xc] sm:$0xf]
        %v325 = vld [vmem:[%s228 + $0x10] sm:$0xf]
        %v326 = vld [vmem:[%s228 + $0x14] sm:$0xf]
        %v327 = vld [vmem:[%s228 + $0x18] sm:$0xf]
        %v328 = vld [vmem:[%s228 + $0x1c] sm:$0xf]
        %v329 = vld [vmem:[%s228 + $0x20] sm:$0xf]
        %v330 = vld [vmem:[%s228 + $0x24] sm:$0xf]
        %v331 = vld [vmem:[%s228 + $0x28] sm:$0xf]
        %v332 = vld [vmem:[%s228 + $0x2c] sm:$0xf]
        %v333 = vld [vmem:[%s228 + $0x30] sm:$0xf]
        %v334 = vld [vmem:[%s228 + $0x34] sm:$0xf]
        %v335 = vld [vmem:[%s228 + $0x38] sm:$0xf]
        %v336 = vld [vmem:[%s228 + $0x3c] sm:$0xf]
        %v353 = vunpack.c.l.b16 %v321
        %v354 = vunpack.c.l.b16 %v322
        %v355 = vunpack.c.l.b16 %v323
        %v356 = vunpack.c.l.b16 %v324
        %v357 = vunpack.c.l.b16 %v325
        %v358 = vunpack.c.l.b16 %v326
        %v359 = vunpack.c.l.b16 %v327
        %v360 = vunpack.c.l.b16 %v328
        %v361 = vunpack.c.l.b16 %v329
        %v362 = vunpack.c.l.b16 %v330
        %v363 = vunpack.c.l.b16 %v331
        %v364 = vunpack.c.l.b16 %v332
        %v365 = vunpack.c.l.b16 %v333
        %v366 = vunpack.c.l.b16 %v334
        %v367 = vunpack.c.l.b16 %v335
        %v368 = vunpack.c.l.b16 %v336
        %v369 = vpack.c.b16 %v354, %v353
        %v370 = vpack.c.b16 %v356, %v355
        %v371 = vpack.c.b16 %v358, %v357
        %v372 = vpack.c.b16 %v360, %v359
        %v373 = vpack.c.b16 %v362, %v361
        %v374 = vpack.c.b16 %v364, %v363
        %v375 = vpack.c.b16 %v366, %v365
        %v376 = vpack.c.b16 %v368, %v367
        %v401 = vunpack.c.l.b16 %v289
        %v402 = vunpack.c.l.b16 %v290
        %v403 = vunpack.c.l.b16 %v291
        %v404 = vunpack.c.l.b16 %v292
        %v405 = vunpack.c.l.b16 %v293
        %v406 = vunpack.c.l.b16 %v294
        %v407 = vunpack.c.l.b16 %v295
        %v408 = vunpack.c.l.b16 %v296
        %v409 = vunpack.c.l.b16 %v297
        %v410 = vunpack.c.l.b16 %v298
        %v411 = vunpack.c.l.b16 %v299
        %v412 = vunpack.c.l.b16 %v300
        %v413 = vunpack.c.l.b16 %v301
        %v414 = vunpack.c.l.b16 %v302
        %v415 = vunpack.c.l.b16 %v303
        %v416 = vunpack.c.l.b16 %v304
        %v417 = vpack.c.b16 %v402, %v401
        %v418 = vpack.c.b16 %v404, %v403
        %v419 = vpack.c.b16 %v406, %v405
        %v420 = vpack.c.b16 %v408, %v407
        %v421 = vpack.c.b16 %v410, %v409
        %v422 = vpack.c.b16 %v412, %v411
        %v423 = vpack.c.b16 %v414, %v413
        %v424 = vpack.c.b16 %v416, %v415
        %433 = vmatprep.subr.bf16.mxu0 0
        %434 = vmatpush1.bf16.msra.mxu0 %v417
        %435 = vmatprep.subr.bf16.mxu0 0
        %436 = vmatpush1.bf16.msra.mxu0 %v418
        %437 = vmatprep.subr.bf16.mxu0 0
        %438 = vmatpush1.bf16.msra.mxu0 %v419
        %439 = vmatprep.subr.bf16.mxu0 0
        %440 = vmatpush1.bf16.msra.mxu0 %v420
        %441 = vmatprep.subr.bf16.mxu0 0
        %442 = vmatpush1.bf16.msra.mxu0 %v421
        %443 = vmatprep.subr.bf16.mxu0 0
        %444 = vmatpush1.bf16.msra.mxu0 %v422
        %445 = vmatprep.subr.bf16.mxu0 0
        %446 = vmatpush1.bf16.msra.mxu0 %v423
        %447 = vmatprep.subr.bf16.mxu0 0
        %448 = vmatpush1.bf16.msra.mxu0 %v424
        %449 = vmatprep.subr.bf16.mxu0 0
        %450 = vmatpush1.bf16.msra.mxu0 0
        %451 = vmatprep.subr.bf16.mxu0 0
        %452 = vmatpush1.bf16.msra.mxu0 0
        %453 = vmatprep.subr.bf16.mxu0 0
        %454 = vmatpush1.bf16.msra.mxu0 0
        %455 = vmatprep.subr.bf16.mxu0 0
        %456 = vmatpush1.bf16.msra.mxu0 0
        %457 = vmatprep.subr.bf16.mxu0 0
        %458 = vmatpush1.bf16.msra.mxu0 0
        %459 = vmatprep.subr.bf16.mxu0 0
        %460 = vmatpush1.bf16.msra.mxu0 0
        %461 = vmatprep.subr.bf16.mxu0 0
        %462 = vmatpush1.bf16.msra.mxu0 0
        %463 = vmatprep.subr.bf16.mxu0 0
        %464 = vmatpush1.bf16.msra.mxu0 0
        %465 = vmatprep.mubr.bf16.mxu0 0
        %466 = vmatmul.mubr.bf16.gmra.mrb[0].mxu0 %v369
        %v467 = vpop.f32.mrb[0].mxu0
        %v468 = vadd.f32 0.0, %v467
        %v469 = vpop.f32.mrb[0].mxu0
        %v470 = vpop.f32.mrb[0].mxu0
        %v471 = vadd.f32 0.0, %v470
        %v472 = vpop.f32.mrb[0].mxu0
        %473 = vmatprep.mubr.bf16.mxu0 0
        %474 = vmatmul.mubr.bf16.gmra.mrb[0].mxu0 %v370
        %v475 = vpop.f32.mrb[0].mxu0
        %v476 = vadd.f32 0.0, %v475
        %v477 = vpop.f32.mrb[0].mxu0
        %v478 = vpop.f32.mrb[0].mxu0
        %v479 = vadd.f32 0.0, %v478
        %v480 = vpop.f32.mrb[0].mxu0
        %481 = vmatprep.mubr.bf16.mxu0 0
        %482 = vmatmul.mubr.bf16.gmra.mrb[0].mxu0 %v371
        %v483 = vpop.f32.mrb[0].mxu0
        %v484 = vadd.f32 0.0, %v483
        %v485 = vpop.f32.mrb[0].mxu0
        %v486 = vpop.f32.mrb[0].mxu0
        %v487 = vadd.f32 0.0, %v486
        %v488 = vpop.f32.mrb[0].mxu0
        %489 = vmatprep.mubr.bf16.mxu0 0
        %490 = vmatmul.mubr.bf16.gmra.mrb[0].mxu0 %v372
        %v491 = vpop.f32.mrb[0].mxu0
        %v492 = vadd.f32 0.0, %v491
        %v493 = vpop.f32.mrb[0].mxu0
        %v494 = vpop.f32.mrb[0].mxu0
        %v495 = vadd.f32 0.0, %v494
        %v496 = vpop.f32.mrb[0].mxu0
        %497 = vmatprep.mubr.bf16.mxu0 0
        %498 = vmatmul.mubr.bf16.gmra.mrb[0].mxu0 %v373
        %v499 = vpop.f32.mrb[0].mxu0
        %v500 = vadd.f32 0.0, %v499
        %v501 = vpop.f32.mrb[0].mxu0
        %v502 = vpop.f32.mrb[0].mxu0
        %v503 = vadd.f32 0.0, %v502
        %v504 = vpop.f32.mrb[0].mxu0
        %505 = vmatprep.mubr.bf16.mxu0 0
        %506 = vmatmul.mubr.bf16.gmra.mrb[0].mxu0 %v374
        %v507 = vpop.f32.mrb[0].mxu0
        %v508 = vadd.f32 0.0, %v507
        %v509 = vpop.f32.mrb[0].mxu0
        %v510 = vpop.f32.mrb[0].mxu0
        %v511 = vadd.f32 0.0, %v510
        %v512 = vpop.f32.mrb[0].mxu0
        %513 = vmatprep.mubr.bf16.mxu0 0
        %514 = vmatmul.mubr.bf16.gmra.mrb[0].mxu0 %v375
        %v515 = vpop.f32.mrb[0].mxu0
        %v516 = vadd.f32 0.0, %v515
        %v517 = vpop.f32.mrb[0].mxu0
        %v518 = vpop.f32.mrb[0].mxu0
        %v519 = vadd.f32 0.0, %v518
        %v520 = vpop.f32.mrb[0].mxu0
        %521 = vmatprep.mubr.bf16.mxu0 0
        %522 = vmatmul.mubr.bf16.gmra.mrb[0].mxu0 %v376
        %v523 = vpop.f32.mrb[0].mxu0
        %v524 = vadd.f32 0.0, %v523
        %v525 = vpop.f32.mrb[0].mxu0
        %v526 = vpop.f32.mrb[0].mxu0
        %v527 = vadd.f32 0.0, %v526
        %v528 = vpop.f32.mrb[0].mxu0
        %529 = vdwg.mxu0
        %v530 = vadd.f32 %v305, %v468
        %v531 = vadd.f32 %v306, %v471
        %v532 = vadd.f32 %v307, %v476
        %v533 = vadd.f32 %v308, %v479
        %v534 = vadd.f32 %v309, %v484
        %v535 = vadd.f32 %v310, %v487
        %v536 = vadd.f32 %v311, %v492
        %v537 = vadd.f32 %v312, %v495
        %v538 = vadd.f32 %v313, %v500
        %v539 = vadd.f32 %v314, %v503
        %v540 = vadd.f32 %v315, %v508
        %v541 = vadd.f32 %v316, %v511
        %v542 = vadd.f32 %v317, %v516
        %v543 = vadd.f32 %v318, %v519
        %v544 = vadd.f32 %v319, %v524
        %v545 = vadd.f32 %v320, %v527
        %546 = vst [vmem:[#allocation2] sm:$0xff] %v530
        %547 = vst [vmem:[#allocation2 + $0x8] sm:$0xff] %v531
        %548 = vst [vmem:[#allocation2 + $0x10] sm:$0xff] %v532
        %549 = vst [vmem:[#allocation2 + $0x18] sm:$0xff] %v533
        %550 = vst [vmem:[#allocation2 + $0x20] sm:$0xff] %v534
        %551 = vst [vmem:[#allocation2 + $0x28] sm:$0xff] %v535
        %552 = vst [vmem:[#allocation2 + $0x30] sm:$0xff] %v536
        %553 = vst [vmem:[#allocation2 + $0x38] sm:$0xff] %v537
        %554 = vst [vmem:[#allocation2 + $0x40] sm:$0xff] %v538
        %555 = vst [vmem:[#allocation2 + $0x48] sm:$0xff] %v539
        %556 = vst [vmem:[#allocation2 + $0x50] sm:$0xff] %v540
        %557 = vst [vmem:[#allocation2 + $0x58] sm:$0xff] %v541
        %558 = vst [vmem:[#allocation2 + $0x60] sm:$0xff] %v542
        %559 = vst [vmem:[#allocation2 + $0x68] sm:$0xff] %v543
        %560 = vst [vmem:[#allocation2 + $0x70] sm:$0xff] %v544
        %561 = vst [vmem:[#allocation2 + $0x78] sm:$0xff] %v545
        %p562 = scmp.eq.s32.totalorder %s27, 1
        // Predicated region
        $region53: #{tpu_custom_call.1} parent=35 // pred_check
          %p563 = pneg %p562
        $region54: #{tpu_custom_call.1} parent=35 // pred_check_branch
          %565 = sbr.rel (%p563) target = $region56
        $region55: #{tpu_custom_call.1} parent=35 // pred_region
          %v566 = vld [vmem:[#allocation2] sm:$0xff]
          %v567 = vld [vmem:[#allocation2 + $0x8] sm:$0xff]
          %v568 = vld [vmem:[#allocation2 + $0x10] sm:$0xff]
          %v569 = vld [vmem:[#allocation2 + $0x18] sm:$0xff]
          %v570 = vld [vmem:[#allocation2 + $0x20] sm:$0xff]
          %v571 = vld [vmem:[#allocation2 + $0x28] sm:$0xff]
          %v572 = vld [vmem:[#allocation2 + $0x30] sm:$0xff]
          %v573 = vld [vmem:[#allocation2 + $0x38] sm:$0xff]
          %v574 = vld [vmem:[#allocation2 + $0x40] sm:$0xff]
          %v575 = vld [vmem:[#allocation2 + $0x48] sm:$0xff]
          %v576 = vld [vmem:[#allocation2 + $0x50] sm:$0xff]
          %v577 = vld [vmem:[#allocation2 + $0x58] sm:$0xff]
          %v578 = vld [vmem:[#allocation2 + $0x60] sm:$0xff]
          %v579 = vld [vmem:[#allocation2 + $0x68] sm:$0xff]
          %v580 = vld [vmem:[#allocation2 + $0x70] sm:$0xff]
          %v581 = vld [vmem:[#allocation2 + $0x78] sm:$0xff]
          %v582 = vpack.c.bf16 %v567, %v566
          %v583 = vpack.c.bf16 %v569, %v568
          %v584 = vpack.c.bf16 %v571, %v570
          %v585 = vpack.c.bf16 %v573, %v572
          %v586 = vpack.c.bf16 %v575, %v574
          %v587 = vpack.c.bf16 %v577, %v576
          %v588 = vpack.c.bf16 %v579, %v578
          %v589 = vpack.c.bf16 %v581, %v580
          %v590 = vld [vmem:[#allocation8] sm:$0xf]
          %v591 = vld [vmem:[#allocation8 + $0x4] sm:$0xf]
          %v592 = vld [vmem:[#allocation8 + $0x8] sm:$0xf]
          %v593 = vld [vmem:[#allocation8 + $0xc] sm:$0xf]
          %v594 = vld [vmem:[#allocation8 + $0x10] sm:$0xf]
          %v595 = vld [vmem:[#allocation8 + $0x14] sm:$0xf]
          %v596 = vld [vmem:[#allocation8 + $0x18] sm:$0xf]
          %v597 = vld [vmem:[#allocation8 + $0x1c] sm:$0xf]
          %v598 = vld [vmem:[#allocation8 + $0x20] sm:$0xf]
          %v599 = vld [vmem:[#allocation8 + $0x24] sm:$0xf]
          %v600 = vld [vmem:[#allocation8 + $0x28] sm:$0xf]
          %v601 = vld [vmem:[#allocation8 + $0x2c] sm:$0xf]
          %v602 = vld [vmem:[#allocation8 + $0x30] sm:$0xf]
          %v603 = vld [vmem:[#allocation8 + $0x34] sm:$0xf]
          %v604 = vld [vmem:[#allocation8 + $0x38] sm:$0xf]
          %v605 = vld [vmem:[#allocation8 + $0x3c] sm:$0xf]
          %v606 = vld [vmem:[%s3] sm:$0x1]
          %v608 = vlaneseq
          %v609 = vshrl.u32 %v608, 7
          %v610 = vsub.s32 0, %v609
          %v611 = vrot.slane %v606, %v610
          %v629 = vunpack.c.l.b16 %v590
          %v630 = vunpack.c.l.b16 %v591
          %v631 = vunpack.c.l.b16 %v592
          %v632 = vunpack.c.l.b16 %v593
          %v633 = vunpack.c.l.b16 %v594
          %v634 = vunpack.c.l.b16 %v595
          %v635 = vunpack.c.l.b16 %v596
          %v636 = vunpack.c.l.b16 %v597
          %v637 = vunpack.c.l.b16 %v598
          %v638 = vunpack.c.l.b16 %v599
          %v639 = vunpack.c.l.b16 %v600
          %v640 = vunpack.c.l.b16 %v601
          %v641 = vunpack.c.l.b16 %v602
          %v642 = vunpack.c.l.b16 %v603
          %v643 = vunpack.c.l.b16 %v604
          %v644 = vunpack.c.l.b16 %v605
          %v645 = vpack.c.b16 %v630, %v629
          %v646 = vpack.c.b16 %v632, %v631
          %v647 = vpack.c.b16 %v634, %v633
          %v648 = vpack.c.b16 %v636, %v635
          %v649 = vpack.c.b16 %v638, %v637
          %v650 = vpack.c.b16 %v640, %v639
          %v651 = vpack.c.b16 %v642, %v641
          %v652 = vpack.c.b16 %v644, %v643
          %661 = vmatprep.subr.bf16.mxu0 0
          %662 = vmatpush1.bf16.msra.mxu0 %v645
          %663 = vmatprep.subr.bf16.mxu0 0
          %664 = vmatpush1.bf16.msra.mxu0 %v646
          %665 = vmatprep.subr.bf16.mxu0 0
          %666 = vmatpush1.bf16.msra.mxu0 %v647
          %667 = vmatprep.subr.bf16.mxu0 0
          %668 = vmatpush1.bf16.msra.mxu0 %v648
          %669 = vmatprep.subr.bf16.mxu0 0
          %670 = vmatpush1.bf16.msra.mxu0 %v649
          %671 = vmatprep.subr.bf16.mxu0 0
          %672 = vmatpush1.bf16.msra.mxu0 %v650
          %673 = vmatprep.subr.bf16.mxu0 0
          %674 = vmatpush1.bf16.msra.mxu0 %v651
          %675 = vmatprep.subr.bf16.mxu0 0
          %676 = vmatpush1.bf16.msra.mxu0 %v652
          %677 = vmatprep.subr.bf16.mxu0 0
          %678 = vmatpush1.bf16.msra.mxu0 0
          %679 = vmatprep.subr.bf16.mxu0 0
          %680 = vmatpush1.bf16.msra.mxu0 0
          %681 = vmatprep.subr.bf16.mxu0 0
          %682 = vmatpush1.bf16.msra.mxu0 0
          %683 = vmatprep.subr.bf16.mxu0 0
          %684 = vmatpush1.bf16.msra.mxu0 0
          %685 = vmatprep.subr.bf16.mxu0 0
          %686 = vmatpush1.bf16.msra.mxu0 0
          %687 = vmatprep.subr.bf16.mxu0 0
          %688 = vmatpush1.bf16.msra.mxu0 0
          %689 = vmatprep.subr.bf16.mxu0 0
          %690 = vmatpush1.bf16.msra.mxu0 0
          %691 = vmatprep.subr.bf16.mxu0 0
          %692 = vmatpush1.bf16.msra.mxu0 0
          %693 = vmatprep.mubr.bf16.mxu0 0
          %694 = vmatmul.mubr.bf16.gmra.mrb[0].mxu0 %v582
          %v695 = vpop.f32.mrb[0].mxu0
          %v696 = vadd.f32 %v611, %v695
          %v697 = vpop.f32.mrb[0].mxu0
          %v698 = vpop.f32.mrb[0].mxu0
          %v699 = vadd.f32 %v611, %v698
          %v700 = vpop.f32.mrb[0].mxu0
          %701 = vmatprep.mubr.bf16.mxu0 0
          %702 = vmatmul.mubr.bf16.gmra.mrb[0].mxu0 %v583
          %v703 = vpop.f32.mrb[0].mxu0
          %v704 = vadd.f32 %v611, %v703
          %v705 = vpop.f32.mrb[0].mxu0
          %v706 = vpop.f32.mrb[0].mxu0
          %v707 = vadd.f32 %v611, %v706
          %v708 = vpop.f32.mrb[0].mxu0
          %709 = vmatprep.mubr.bf16.mxu0 0
          %710 = vmatmul.mubr.bf16.gmra.mrb[0].mxu0 %v584
          %v711 = vpop.f32.mrb[0].mxu0
          %v712 = vadd.f32 %v611, %v711
          %v713 = vpop.f32.mrb[0].mxu0
          %v714 = vpop.f32.mrb[0].mxu0
          %v715 = vadd.f32 %v611, %v714
          %v716 = vpop.f32.mrb[0].mxu0
          %717 = vmatprep.mubr.bf16.mxu0 0
          %718 = vmatmul.mubr.bf16.gmra.mrb[0].mxu0 %v585
          %v719 = vpop.f32.mrb[0].mxu0
          %v720 = vadd.f32 %v611, %v719
          %v721 = vpop.f32.mrb[0].mxu0
          %v722 = vpop.f32.mrb[0].mxu0
          %v723 = vadd.f32 %v611, %v722
          %v724 = vpop.f32.mrb[0].mxu0
          %725 = vmatprep.mubr.bf16.mxu0 0
          %726 = vmatmul.mubr.bf16.gmra.mrb[0].mxu0 %v586
          %v727 = vpop.f32.mrb[0].mxu0
          %v728 = vadd.f32 %v611, %v727
          %v729 = vpop.f32.mrb[0].mxu0
          %v730 = vpop.f32.mrb[0].mxu0
          %v731 = vadd.f32 %v611, %v730
          %v732 = vpop.f32.mrb[0].mxu0
          %733 = vmatprep.mubr.bf16.mxu0 0
          %734 = vmatmul.mubr.bf16.gmra.mrb[0].mxu0 %v587
          %v735 = vpop.f32.mrb[0].mxu0
          %v736 = vadd.f32 %v611, %v735
          %v737 = vpop.f32.mrb[0].mxu0
          %v738 = vpop.f32.mrb[0].mxu0
          %v739 = vadd.f32 %v611, %v738
          %v740 = vpop.f32.mrb[0].mxu0
          %741 = vmatprep.mubr.bf16.mxu0 0
          %742 = vmatmul.mubr.bf16.gmra.mrb[0].mxu0 %v588
          %v743 = vpop.f32.mrb[0].mxu0
          %v744 = vadd.f32 %v611, %v743
          %v745 = vpop.f32.mrb[0].mxu0
          %v746 = vpop.f32.mrb[0].mxu0
          %v747 = vadd.f32 %v611, %v746
          %v748 = vpop.f32.mrb[0].mxu0
          %749 = vmatprep.mubr.bf16.mxu0 0
          %750 = vmatmul.mubr.bf16.gmra.mrb[0].mxu0 %v589
          %v751 = vpop.f32.mrb[0].mxu0
          %v752 = vadd.f32 %v611, %v751
          %v753 = vpop.f32.mrb[0].mxu0
          %v754 = vpop.f32.mrb[0].mxu0
          %v755 = vadd.f32 %v611, %v754
          %v756 = vpop.f32.mrb[0].mxu0
          %757 = vdwg.mxu0
          %v758 = vmax.f32 %v696, 0.0
          %v759 = vmax.f32 %v699, 0.0
          %v760 = vmax.f32 %v704, 0.0
          %v761 = vmax.f32 %v707, 0.0
          %v762 = vmax.f32 %v712, 0.0
          %v763 = vmax.f32 %v715, 0.0
          %v764 = vmax.f32 %v720, 0.0
          %v765 = vmax.f32 %v723, 0.0
          %v766 = vmax.f32 %v728, 0.0
          %v767 = vmax.f32 %v731, 0.0
          %v768 = vmax.f32 %v736, 0.0
          %v769 = vmax.f32 %v739, 0.0
          %v770 = vmax.f32 %v744, 0.0
          %v771 = vmax.f32 %v747, 0.0
          %v772 = vmax.f32 %v752, 0.0
          %v773 = vmax.f32 %v755, 0.0
          %v774 = vpack.c.bf16 %v759, %v758
          %v775 = vpack.c.bf16 %v761, %v760
          %v776 = vpack.c.bf16 %v763, %v762
          %v777 = vpack.c.bf16 %v765, %v764
          %v778 = vpack.c.bf16 %v767, %v766
          %v779 = vpack.c.bf16 %v769, %v768
          %v780 = vpack.c.bf16 %v771, %v770
          %v781 = vpack.c.bf16 %v773, %v772
          %v790 = vunpack.c.l.b16 %v774
          %v791 = vunpack.c.h.b16 %v774
          %v792 = vunpack.c.l.b16 %v775
          %v793 = vunpack.c.h.b16 %v775
          %v794 = vunpack.c.l.b16 %v776
          %v795 = vunpack.c.h.b16 %v776
          %v796 = vunpack.c.l.b16 %v777
          %v797 = vunpack.c.h.b16 %v777
          %v798 = vunpack.c.l.b16 %v778
          %v799 = vunpack.c.h.b16 %v778
          %v800 = vunpack.c.l.b16 %v779
          %v801 = vunpack.c.h.b16 %v779
          %v802 = vunpack.c.l.b16 %v780
          %v803 = vunpack.c.h.b16 %v780
          %v804 = vunpack.c.l.b16 %v781
          %v805 = vunpack.c.h.b16 %v781
          %v806 = vpack.c.b16 %v790, %v790
          %v807 = vpack.c.b16 %v791, %v791
          %v808 = vpack.c.b16 %v792, %v792
          %v809 = vpack.c.b16 %v793, %v793
          %v810 = vpack.c.b16 %v794, %v794
          %v811 = vpack.c.b16 %v795, %v795
          %v812 = vpack.c.b16 %v796, %v796
          %v813 = vpack.c.b16 %v797, %v797
          %v814 = vpack.c.b16 %v798, %v798
          %v815 = vpack.c.b16 %v799, %v799
          %v816 = vpack.c.b16 %v800, %v800
          %v817 = vpack.c.b16 %v801, %v801
          %v818 = vpack.c.b16 %v802, %v802
          %v819 = vpack.c.b16 %v803, %v803
          %v820 = vpack.c.b16 %v804, %v804
          %v821 = vpack.c.b16 %v805, %v805
          %838 = vst [vmem:[%s260] sm:$0xf] %v806
          %839 = vst [vmem:[%s260 + $0x4] sm:$0xf] %v807
          %840 = vst [vmem:[%s260 + $0x8] sm:$0xf] %v808
          %841 = vst [vmem:[%s260 + $0xc] sm:$0xf] %v809
          %842 = vst [vmem:[%s260 + $0x10] sm:$0xf] %v810
          %843 = vst [vmem:[%s260 + $0x14] sm:$0xf] %v811
          %844 = vst [vmem:[%s260 + $0x18] sm:$0xf] %v812
          %845 = vst [vmem:[%s260 + $0x1c] sm:$0xf] %v813
          %846 = vst [vmem:[%s260 + $0x20] sm:$0xf] %v814
          %847 = vst [vmem:[%s260 + $0x24] sm:$0xf] %v815
          %848 = vst [vmem:[%s260 + $0x28] sm:$0xf] %v816
          %849 = vst [vmem:[%s260 + $0x2c] sm:$0xf] %v817
          %850 = vst [vmem:[%s260 + $0x30] sm:$0xf] %v818
          %851 = vst [vmem:[%s260 + $0x34] sm:$0xf] %v819
          %852 = vst [vmem:[%s260 + $0x38] sm:$0xf] %v820
          %853 = vst [vmem:[%s260 + $0x3c] sm:$0xf] %v821
        $region56: #{tpu_custom_call.1} parent=35 // pred_fallthru
          _
        %s854 = sand.u32 %s133, 1
        %s855 = scalar_lea.sflag [#allocation5], %s854
        %s856 = sand.u32 %s133, 1
        %s857 = smul.addr %s856, 64
        %s858 = scalar_lea.vmem [#allocation9], %s857
        // Predicated region
        $region57: #{tpu_custom_call.1} parent=35 // pred_check
          %p859 = pneg %p143
        $region58: #{tpu_custom_call.1} parent=35 // pred_check_branch
          %861 = sbr.rel (%p859) target = $region60
        $region59: #{tpu_custom_call.1} parent=35 // pred_region
          %s862 = smul.u32 16, %s26
          %s864 = ssub.s32 1024, 1024
          %865 = vsyncadd %s855, %s864
          %s866 = smul.addr %s862, 64
          %s867 = scalar_lea.hbm %s4, %s866
          %s868 = sshll.u32 %s858, 4
          %s869 = int_to_ptr.vmem [resolvable:$true] %s868
          %874 = dma.vmem_to_hbm [thread:$0]  %s869, 1024, %s867, %s855, 64, 64, 4
        $region60: #{tpu_custom_call.1} parent=35 // pred_fallthru
          _
      $region36: #{tpu_custom_call.1} parent=5 // pred_fallthru
        _
      %p875 = scmp.le.s32.totalorder 2, %s17
      // Predicated region
      $region61: #{tpu_custom_call.1} parent=5 // pred_check
        %p876 = pneg %p875
      $region62: #{tpu_custom_call.1} parent=5 // pred_check_branch
        %878 = sbr.rel (%p876) target = $region64
      $region63: #{tpu_custom_call.1} parent=5 // pred_region
        %s879 = ssub.s32 %s17, 2
        // Predicated region
        $region65: #{tpu_custom_call.1} parent=63 // pred_check
          %p880 = pneg %p149
        $region66: #{tpu_custom_call.1} parent=63 // pred_check_branch
          %882 = sbr.rel (%p880) target = $region68
        $region67: #{tpu_custom_call.1} parent=63 // pred_region
          %s883 = sand.u32 %s134, 1
          %s884 = scalar_lea.sflag [#allocation5], %s883
          %s885 = sand.u32 %s134, 1
          %s886 = smul.addr %s885, 64
          %s887 = scalar_lea.vmem [#allocation9], %s886
          %888 = dma.done %s884, 1024
        $region68: #{tpu_custom_call.1} parent=63 // pred_fallthru
          _
      $region64: #{tpu_custom_call.1} parent=5 // pred_fallthru
        _
    $region6: #{tpu_custom_call.1} parent=1 // loop_footer
      %s21 = sadd.s32 1, %s17
    $region7: #{tpu_custom_call.1} parent=1 // loop_footer_branch
      %16 = sbr.rel target = $region3
    $region8: #{tpu_custom_call.1} parent=1 // loop_exit
      _
    %889 = vsyncpa [#allocation4], 1
    %s890 = scalar_lea.sflag [#allocation4], 1
    %891 = vsyncpa %s890, 1
    %892 = vsyncpa [#allocation7], 1
    %893 = vsyncpa [#allocation5], 1
    %s894 = scalar_lea.sflag [#allocation5], 1
    %895 = vsyncpa %s894, 1

</llo_original>
